<compile_context>
chip_gen: v7x
topology: tpu7x:2x2x1
jax: 0.10.0
libtpu: 0.0.40
codegen_flags: <defaults>
</compile_context>

<pallas_src>
import jax
import jax.numpy as jnp
from jax import lax
from jax.experimental import pallas as pl
from jax.experimental.pallas import tpu as pltpu


def _round_up(x, m):
    return ((x + m - 1) // m) * m


def _patch_embed_kernel(x_ref, w_ref, b_ref, o_ref):
    # x_ref: (tm, K) streamed patch rows
    # w_ref: (K, E) resident projection   b_ref: (1, E) resident bias (f32)
    acc = jnp.dot(x_ref[...], w_ref[...], preferred_element_type=jnp.float32)
    o_ref[...] = (acc + b_ref[...].astype(jnp.float32)).astype(o_ref.dtype)


def patch_embedding(x, weight, bias, patch_size, *,
                    compute_dtype=None, out_dtype=None,
                    max_tm=2048, vmem_budget_bytes=40 * 1024 * 1024):
    """x: (B, C, H, W) NCHW; weight: (E, C, P, P) conv layout; bias: (E,).

    Returns (B, n_patches, E) — same semantics as the PyTorch module.
    `compute_dtype=jnp.bfloat16` halves HBM traffic; accumulation stays f32.
    """
    B, C, H, W = x.shape
    E = weight.shape[0]
    P = patch_size
    hp, wp = H // P, W // P
    n_patches = hp * wp
    M = B * n_patches
    K = C * P * P

    if compute_dtype is None:
        compute_dtype = x.dtype
    if out_dtype is None:
        out_dtype = compute_dtype

    # --- glue: patch matrix in (c, ph, pw) feature order, in compute dtype ---
    # TODO(synk): accept patch-major/NHWC activations upstream (or gather the
    # contiguous (1, C, P, W) slabs in-kernel) so this im2col transpose stops
    # costing an extra HBM pass on a memory-bound op.
    x_c = x.astype(compute_dtype)
    x_p = x_c.reshape(B, C, hp, P, wp, P)            # (B, C, hp, P, wp, P)
    x_p = jnp.transpose(x_p, (0, 2, 4, 1, 3, 5))     # (B, hp, wp, C, P, P)
    x_mat = x_p.reshape(M, K)                        # (M, K)

    # TODO(synk): store/cache the projection pre-transposed as (K, E) so this
    # small weight reshape+transpose is not redone on every forward call.
    w_mat = weight.reshape(E, K).T.astype(compute_dtype)   # (K, E)
    b_mat = bias.reshape(1, E).astype(jnp.float32)          # (1, E)

    in_size = jnp.dtype(compute_dtype).itemsize
    out_size = jnp.dtype(out_dtype).itemsize

    # ---- row-tile sizing: weight/bias resident, x & out double-buffered ----
    resident_bytes = 2 * (K * E * in_size + E * 4)
    per_row_bytes = 2 * (K * in_size + E * out_size)
    tm = (vmem_budget_bytes - resident_bytes) // per_row_bytes
    tm = int(min(tm, max_tm))
    if M > 4 * 256:
        # keep >= 4 row tiles so both v7x TensorCores get several blocks
        tm = min(tm, _round_up(pl.cdiv(M, 4), 256))
    if tm >= M:
        tm = M                        # single tile: block dim == full array dim
    elif tm >= 256:
        tm = (tm // 256) * 256        # MXU-friendly (v6e/v7x 256; v5e 128)
    else:
        tm = max((tm // 8) * 8, 8)    # sublane aligned
    grid_m = pl.cdiv(M, tm)

    cost = pl.CostEstimate(
        flops=2 * M * K * E,
        transcendentals=0,
        bytes_accessed=(M * K * in_size      # patch rows, streamed once
                        + K * E * in_size    # resident weight, fetched once
                        + M * E * out_size   # output writeback
                        + E * 4),            # bias
    )

    out = pl.pallas_call(
        _patch_embed_kernel,
        out_shape=jax.ShapeDtypeStruct((M, E), out_dtype),
        grid_spec=pltpu.PrefetchScalarGridSpec(
            num_scalar_prefetch=0,
            grid=(grid_m,),
            in_specs=[
                pl.BlockSpec((tm, K), lambda i: (i, 0)),  # streamed patch rows
                pl.BlockSpec((K, E), lambda i: (0, 0)),   # resident projection
                pl.BlockSpec((1, E), lambda i: (0, 0)),   # resident bias
            ],
            out_specs=pl.BlockSpec((tm, E), lambda i: (i, 0)),
        ),
        compiler_params=pltpu.CompilerParams(
            dimension_semantics=("parallel",),
            # 48 MiB scoped VMEM: headroom under v7x's 64 MiB physical,
            # comfortable on v5e/v6e's 128 MiB.
            vmem_limit_bytes=48 * 1024 * 1024,
        ),
        cost_estimate=cost,
    )(x_mat, w_mat, b_mat)

    return out.reshape(B, n_patches, E)


if __name__ == "__main__":
    # Small shapes consistent with the module.
    img_size = 16
    patch_size = 4
    in_channels = 4
    embed_dim = 32
    batch = 2

    key = jax.random.PRNGKey(0)
    kx, kw, kb = jax.random.split(key, 3)

    x = jax.random.normal(kx, (batch, in_channels, img_size, img_size),
                          dtype=jnp.float32)
    weight = jax.random.normal(
        kw, (embed_dim, in_channels, patch_size, patch_size),
        dtype=jnp.float32) * 0.02
    bias = jax.random.normal(kb, (embed_dim,), dtype=jnp.float32) * 0.02

    # Reference: plain XLA conv with kernel=stride=patch_size, NCHW.
    ref = lax.conv_general_dilated(
        x, weight,
        window_strides=(patch_size, patch_size),
        padding="VALID",
        dimension_numbers=("NCHW", "OIHW", "NCHW"),
    ) + bias.reshape(1, embed_dim, 1, 1)
    n_patches = (img_size // patch_size) ** 2
    ref = ref.reshape(batch, embed_dim, n_patches).transpose(0, 2, 1)

    # f32 path — exact check against the conv reference.
    out = jax.block_until_ready(patch_embedding(x, weight, bias, patch_size))
    assert out.shape == (batch, n_patches, embed_dim), out.shape
    assert jnp.allclose(out, ref, atol=1e-4, rtol=1e-4), (
        float(jnp.max(jnp.abs(out - ref))))

    # bf16-compute path (recommended optimized mode) — f32 MXU accumulation.
    out_bf16 = jax.block_until_ready(
        patch_embedding(x, weight, bias, patch_size,
                        compute_dtype=jnp.bfloat16))
    assert out_bf16.shape == (batch, n_patches, embed_dim), out_bf16.shape
    assert jnp.allclose(out_bf16.astype(jnp.float32), ref,
                        atol=3e-2, rtol=3e-2), (
        float(jnp.max(jnp.abs(out_bf16.astype(jnp.float32) - ref))))

    print("KERNEL_OK")
</pallas_src>

<mosaic_0001>
module attributes {stable_mosaic.version = 11 : i64} {
  func.func @_patch_embed_kernel(%arg0: i32, %arg1: memref<32x64xf32, #tpu.memory_space<vmem>>, %arg2: memref<64x32xf32, #tpu.memory_space<vmem>>, %arg3: memref<1x32xf32, #tpu.memory_space<vmem>>, %arg4: memref<32x32xf32, #tpu.memory_space<vmem>>) attributes {dimension_semantics = [#tpu.dimension_semantics<parallel>], iteration_bounds = array<i64: 1>, scalar_prefetch = 0 : i64, scratch_operands = 0 : i64, tpu.core_type = #tpu.core_type<tc>, window_params = [{transform_indices = @transform_0, window_bounds = array<i64: 32, 64>}, {pipeline_mode = #tpu.pipeline_mode<synchronous>, transform_indices = @transform_1, window_bounds = array<i64: 64, 32>}, {pipeline_mode = #tpu.pipeline_mode<synchronous>, transform_indices = @transform_2, window_bounds = array<i64: 1, 32>}, {transform_indices = @transform_3, window_bounds = array<i64: 32, 32>}]} {
    %c0 = arith.constant 0 : index
    %c0_0 = arith.constant 0 : index
    %0 = vector.load %arg1[%c0, %c0_0] : memref<32x64xf32, #tpu.memory_space<vmem>>, vector<32x64xf32>
    %c0_1 = arith.constant 0 : index
    %c0_2 = arith.constant 0 : index
    %1 = vector.load %arg2[%c0_1, %c0_2] : memref<64x32xf32, #tpu.memory_space<vmem>>, vector<64x32xf32>
    %cst = arith.constant dense<0.000000e+00> : vector<32x32xf32>
    %2 = tpu.matmul %0, %1, %cst {dimension_numbers = #tpu.dot_dimension_numbers<[1], [0], [0], [1], [0, 0, 1, 1], [], []>} : vector<32x64xf32>, vector<64x32xf32>, vector<32x32xf32> -> vector<32x32xf32>
    %c0_3 = arith.constant 0 : index
    %c0_4 = arith.constant 0 : index
    %3 = vector.load %arg3[%c0_3, %c0_4] : memref<1x32xf32, #tpu.memory_space<vmem>>, vector<1x32xf32>
    %4 = vector.broadcast %3 : vector<1x32xf32> to vector<32x32xf32>
    %5 = arith.addf %2, %4 : vector<32x32xf32>
    %c0_5 = arith.constant 0 : index
    %c0_6 = arith.constant 0 : index
    %6 = vector.load %arg4[%c0_5, %c0_6] : memref<32x32xf32, #tpu.memory_space<vmem>>, vector<32x32xf32>
    tpu.vector_store %arg4[%c0_5, %c0_6], %5 {strides = array<i32>} : memref<32x32xf32, #tpu.memory_space<vmem>>, vector<32x32xf32>,
    return
  }
  func.func @transform_0(%arg0: i32) -> (i32, i32) {
    %c0_i32 = arith.constant 0 : i32
    %c0_i32_0 = arith.constant 0 : i32
    return %arg0, %c0_i32 : i32, i32
  }
  func.func @transform_1(%arg0: i32) -> (i32, i32) {
    %c0_i32 = arith.constant 0 : i32
    %c0_i32_0 = arith.constant 0 : i32
    %c0_i32_1 = arith.constant 0 : i32
    return %c0_i32, %c0_i32_0 : i32, i32
  }
  func.func @transform_2(%arg0: i32) -> (i32, i32) {
    %c0_i32 = arith.constant 0 : i32
    %c0_i32_0 = arith.constant 0 : i32
    %c0_i32_1 = arith.constant 0 : i32
    return %c0_i32, %c0_i32_0 : i32, i32
  }
  func.func @transform_3(%arg0: i32) -> (i32, i32) {
    %c0_i32 = arith.constant 0 : i32
    %c0_i32_0 = arith.constant 0 : i32
    return %arg0, %c0_i32 : i32, i32
  }
}

</mosaic_0001>

<llo_original>
// kernel: tpu_custom_call.1
$region0: #{tpu_custom_call.1}
  #allocation0 [shape = 'u32[]', space=smem, size = 0x4, offset = 0x4, fixed_abs, tag = 'smem constant byte address 0x4 - core index']
  #allocation1 [shape = 'u32[144,128]{1,0:T(1,128)}', space=vmem, size = 0x12000, scoped, tag = 'internal scratch']
  %s0 = inlined_call_operand.vmem [shape: f32[32,64], index: 0, kind: input, shape index: {}]
  %s1 = inlined_call_operand.vmem [shape: f32[64,32], index: 1, kind: input, shape index: {}]
  %s2 = inlined_call_operand.vmem [shape: f32[1,32], index: 2, kind: input, shape index: {}]
  %s3 = inlined_call_operand.hbm [shape: f32[32,32], index: 3, kind: output, shape index: {}]
  %s4 = sld [smem:[#allocation0]]
  $region22: #{tpu_custom_call.1} parent=0
    _
  %s6 = ssub.s32 1, %s4
  %s7 = scalar_select 0, %s6, %s4
  $region1: #{tpu_custom_call.1} parent=0
    #allocation2 [shape = 'u8[16384]{0}', space=vmem, size = 0x4000, scoped, tag = 'output window, operand 0, single buffered']
    #allocation3 [shape = 's32[1]{0}', space=sflag, size = 0x4, scoped, tag = 'scoped memory for tpu_custom_call.1']
    %8 = vsyncpa [#allocation3], 0
    // Predicated region
    $region2: #{tpu_custom_call.1} parent=1 // pred_check
      _
    $region3: #{tpu_custom_call.1} parent=1 // pred_check_branch
      %10 = sbr.rel (0) target = $region5
    $region4: #{tpu_custom_call.1} parent=1 // pred_region
      _
    $region5: #{tpu_custom_call.1} parent=1 // pred_fallthru
      _
    // Predicated region
    $region6: #{tpu_custom_call.1} parent=1 // pred_check
      _
    $region7: #{tpu_custom_call.1} parent=1 // pred_check_branch
      %12 = sbr.rel (0) target = $region9
    $region8: #{tpu_custom_call.1} parent=1 // pred_region
      _
    $region9: #{tpu_custom_call.1} parent=1 // pred_fallthru
      _
    // Predicated region
    $region10: #{tpu_custom_call.1} parent=1 // pred_check
      _
    $region11: #{tpu_custom_call.1} parent=1 // pred_check_branch
      %14 = sbr.rel (0) target = $region13
    $region12: #{tpu_custom_call.1} parent=1 // pred_region
      _
    $region13: #{tpu_custom_call.1} parent=1 // pred_fallthru
      _
    %v15 = vld [vmem:[%s0] sm:$0xff]
    %v16 = vld [vmem:[%s0 + $0x8] sm:$0xff]
    %v17 = vld [vmem:[%s0 + $0x10] sm:$0xff]
    %v18 = vld [vmem:[%s0 + $0x18] sm:$0xff]
    %v19 = vld [vmem:[%s1] sm:$0xff]
    %v20 = vld [vmem:[%s1 + $0x8] sm:$0xff]
    %v21 = vld [vmem:[%s1 + $0x10] sm:$0xff]
    %v22 = vld [vmem:[%s1 + $0x18] sm:$0xff]
    %v23 = vld [vmem:[%s1 + $0x20] sm:$0xff]
    %v24 = vld [vmem:[%s1 + $0x28] sm:$0xff]
    %v25 = vld [vmem:[%s1 + $0x30] sm:$0xff]
    %v26 = vld [vmem:[%s1 + $0x38] sm:$0xff]
    %v27 = vld [vmem:[%s2] sm:$0x1]
    %v29 = vlaneseq
    %v30 = vshrl.u32 %v29, 7
    %v31 = vsub.s32 0, %v30
    %v32 = vrot.slane %v27, %v31
    %vm34 = vcmask 523264
    %v36 = vsel %vm34, %v15, 0
    %v39 = vsel %vm34, %v16, 0
    %v42 = vsel %vm34, %v17, 0
    %v45 = vsel %vm34, %v18, 0
    %47 = vmatprep.subr.mxu0 0.0
    %48 = vmatpush1.msra.mxu0 %v19
    %49 = vmatprep.subr.mxu0 0.0
    %50 = vmatpush1.msra.mxu0 %v20
    %51 = vmatprep.subr.mxu0 0.0
    %52 = vmatpush1.msra.mxu0 %v21
    %53 = vmatprep.subr.mxu0 0.0
    %54 = vmatpush1.msra.mxu0 %v22
    %55 = vmatprep.subr.mxu0 0.0
    %56 = vmatpush1.msra.mxu0 %v23
    %57 = vmatprep.subr.mxu0 0.0
    %58 = vmatpush1.msra.mxu0 %v24
    %59 = vmatprep.subr.mxu0 0.0
    %60 = vmatpush1.msra.mxu0 %v25
    %61 = vmatprep.subr.mxu0 0.0
    %62 = vmatpush1.msra.mxu0 %v26
    %63 = vmatprep.subr.mxu0 0.0
    %64 = vmatpush1.msra.mxu0 0.0
    %65 = vmatprep.subr.mxu0 0.0
    %66 = vmatpush1.msra.mxu0 0.0
    %67 = vmatprep.subr.mxu0 0.0
    %68 = vmatpush1.msra.mxu0 0.0
    %69 = vmatprep.subr.mxu0 0.0
    %70 = vmatpush1.msra.mxu0 0.0
    %71 = vmatprep.subr.mxu0 0.0
    %72 = vmatpush1.msra.mxu0 0.0
    %73 = vmatprep.subr.mxu0 0.0
    %74 = vmatpush1.msra.mxu0 0.0
    %75 = vmatprep.subr.mxu0 0.0
    %76 = vmatpush1.msra.mxu0 0.0
    %77 = vmatprep.subr.mxu0 0.0
    %78 = vmatpush1.msra.mxu0 0.0
    %79 = vmatprep.subr.mxu0 0.0
    %80 = vmatpush1.msra.mxu0 0.0
    %81 = vmatprep.subr.mxu0 0.0
    %82 = vmatpush1.msra.mxu0 0.0
    %83 = vmatprep.subr.mxu0 0.0
    %84 = vmatpush1.msra.mxu0 0.0
    %85 = vmatprep.subr.mxu0 0.0
    %86 = vmatpush1.msra.mxu0 0.0
    %87 = vmatprep.subr.mxu0 0.0
    %88 = vmatpush1.msra.mxu0 0.0
    %89 = vmatprep.subr.mxu0 0.0
    %90 = vmatpush1.msra.mxu0 0.0
    %91 = vmatprep.subr.mxu0 0.0
    %92 = vmatpush1.msra.mxu0 0.0
    %93 = vmatprep.subr.mxu0 0.0
    %94 = vmatpush1.msra.mxu0 0.0
    %95 = vmatprep.subr.mxu0 0.0
    %96 = vmatpush1.msra.mxu0 0.0
    %97 = vmatprep.subr.mxu0 0.0
    %98 = vmatpush1.msra.mxu0 0.0
    %99 = vmatprep.subr.mxu0 0.0
    %100 = vmatpush1.msra.mxu0 0.0
    %101 = vmatprep.subr.mxu0 0.0
    %102 = vmatpush1.msra.mxu0 0.0
    %103 = vmatprep.subr.mxu0 0.0
    %104 = vmatpush1.msra.mxu0 0.0
    %105 = vmatprep.subr.mxu0 0.0
    %106 = vmatpush1.msra.mxu0 0.0
    %107 = vmatprep.subr.mxu0 0.0
    %108 = vmatpush1.msra.mxu0 0.0
    %109 = vmatprep.subr.mxu0 0.0
    %110 = vmatpush1.msra.mxu0 0.0
    %111 = vmatprep.mubr.f32.mxu0 0.0
    %112 = vmatmul.mubr.f32.gmra.mrb[0].mxu0 %v36
    %v113 = vpop.f32.mrb[0].mxu0
    %v114 = vadd.f32 %v32, %v113
    %v115 = vpop.f32.mrb[0].mxu0
    %116 = vmatprep.mubr.f32.mxu0 0.0
    %117 = vmatmul.mubr.f32.gmra.mrb[0].mxu0 %v39
    %v118 = vpop.f32.mrb[0].mxu0
    %v119 = vadd.f32 %v32, %v118
    %v120 = vpop.f32.mrb[0].mxu0
    %121 = vmatprep.mubr.f32.mxu0 0.0
    %122 = vmatmul.mubr.f32.gmra.mrb[0].mxu0 %v42
    %v123 = vpop.f32.mrb[0].mxu0
    %v124 = vadd.f32 %v32, %v123
    %v125 = vpop.f32.mrb[0].mxu0
    %126 = vmatprep.mubr.f32.mxu0 0.0
    %127 = vmatmul.mubr.f32.gmra.mrb[0].mxu0 %v45
    %v128 = vpop.f32.mrb[0].mxu0
    %v129 = vadd.f32 %v32, %v128
    %v130 = vpop.f32.mrb[0].mxu0
    %131 = vdwg.mxu0
    %vm132 = vcmask 261120
    %133 = vst.msk [vmem:[#allocation2] sm:$0xff] %vm132, %v114
    %134 = vst.msk [vmem:[#allocation2 + $0x8] sm:$0xff] %vm132, %v119
    %135 = vst.msk [vmem:[#allocation2 + $0x10] sm:$0xff] %vm132, %v124
    %136 = vst.msk [vmem:[#allocation2 + $0x18] sm:$0xff] %vm132, %v129
    // Predicated region
    $region14: #{tpu_custom_call.1} parent=1 // pred_check
      _
    $region15: #{tpu_custom_call.1} parent=1 // pred_check_branch
      %138 = sbr.rel (0) target = $region17
    $region16: #{tpu_custom_call.1} parent=1 // pred_region
      %s140 = ssub.s32 512, 512
      %141 = vsyncadd [#allocation3], %s140
      %s142 = sshll.u32 [#allocation2], 4
      %s143 = int_to_ptr.vmem [resolvable:$true] %s142
      %148 = dma.vmem_to_hbm [thread:$0]  %s143, 512, %s3, [#allocation3], 128, 128, 8
    $region17: #{tpu_custom_call.1} parent=1 // pred_fallthru
      _
    // Predicated region
    $region18: #{tpu_custom_call.1} parent=1 // pred_check
      _
    $region19: #{tpu_custom_call.1} parent=1 // pred_check_branch
      %150 = sbr.rel (0) target = $region21
    $region20: #{tpu_custom_call.1} parent=1 // pred_region
      %151 = dma.done [#allocation3], 512
    $region21: #{tpu_custom_call.1} parent=1 // pred_fallthru
      _
    %152 = vsyncpa [#allocation3], 1

</llo_original>
